<compile_context>
chip_gen: v7x
topology: tpu7x:2x2x1
jax: 0.10.0
libtpu: 0.0.40
codegen_flags: <defaults>
</compile_context>

<pallas_src>
import jax
import jax.numpy as jnp
from jax.experimental import pallas as pl
from jax.experimental.pallas import tpu as pltpu


# ------------------------------------------------------------------ helpers

def _l2_normalize_rows(x):
    # F.normalize(x, p=2, dim=1) == x / clamp(||x||_2, 1e-12)
    #                            == x * rsqrt(clamp(sum(x^2), 1e-24))
    ss = jnp.sum(x * x, axis=1, keepdims=True)
    return x * jax.lax.rsqrt(jnp.maximum(ss, 1e-24))


# ------------------------------------------------------------------ kernel

def _fused_branch_kernel(adj_ref, w1_ref, b1_ref, w2_ref, b2_ref,
                         mw1_ref, mb1_ref, mw2_ref, mb2_ref,
                         mw3_ref, mb3_ref, score_ref):
    """One adjacency branch of GNN_Bet1, fully VMEM-resident.

    Grid axis 0 (size 2, 'parallel') selects the branch (adj1 / adj2).
    """
    f32 = jnp.float32
    bf16 = jnp.bfloat16

    adj = adj_ref[0]                                           # (N, N) bf16

    # gc1: x1 = normalize(relu(adj @ W1 + b1), p=2, dim=1)
    h1 = jnp.dot(adj, w1_ref[...], preferred_element_type=f32) + b1_ref[...]
    x1 = _l2_normalize_rows(jnp.maximum(h1, 0.0))              # (N, H) f32
    x1_b = x1.astype(bf16)                                     # cast once, reuse

    # gc2: x2 = relu(adj @ (x1 @ W2) + b2)
    support = jnp.dot(x1_b, w2_ref[...], preferred_element_type=f32)
    h2 = jnp.dot(adj, support.astype(bf16),
                 preferred_element_type=f32) + b2_ref[...]
    x2_b = jnp.maximum(h2, 0.0).astype(bf16)                   # (N, H)

    # MLP applied to both layer outputs, batched along rows (M = 2N).
    xcat = jnp.concatenate([x1_b, x2_b], axis=0)               # (2N, H) bf16
    m1 = jnp.dot(xcat, mw1_ref[...], preferred_element_type=f32) + mb1_ref[...]
    m1 = jnp.maximum(m1, 0.0)                                  # (2N, 2H) f32
    m2 = jnp.dot(m1.astype(bf16), mw2_ref[...],
                 preferred_element_type=f32) + mb2_ref[...]
    m2 = jnp.maximum(m2, 0.0)                                  # (2N, 2H) f32

    # Final Linear(2H, 1): VPU broadcast-multiply + XLU lane reduction.
    s = jnp.sum(m2 * mw3_ref[...], axis=-1, keepdims=True) + mb3_ref[...]  # (2N, 1)

    n = x1.shape[0]
    score_ref[0] = s[:n] + s[n:]          # score = MLP(x_1) + MLP(x_2), (N, 1)


# ------------------------------------------------------------------ wrapper

def gnn_bet1_forward(adj1, adj2, params):
    """Forward pass of GNN_Bet1. Returns [N, 1] scores (score1 * score2)."""
    N = adj1.shape[0]
    H = params["gc2_w"].shape[0]
    bf16 = jnp.bfloat16
    f32 = jnp.float32

    # Stack the two branches; bf16 operands halve DMA bytes and feed the MXU
    # at native rate on v6e/v7x. Biases stay f32 (added post-matmul).
    adj = jnp.stack([adj1, adj2], axis=0).astype(bf16)         # (2, N, N)
    w1 = params["gc1_w"].astype(bf16)
    b1 = params["gc1_b"].reshape(1, -1).astype(f32)
    w2 = params["gc2_w"].astype(bf16)
    b2 = params["gc2_b"].reshape(1, -1).astype(f32)
    mw1 = params["mlp_w1"].astype(bf16)
    mb1 = params["mlp_b1"].reshape(1, -1).astype(f32)
    mw2 = params["mlp_w2"].astype(bf16)
    mb2 = params["mlp_b2"].reshape(1, -1).astype(f32)
    mw3 = params["mlp_w3"].reshape(1, -1).astype(f32)          # (1, 2H) row
    mb3 = params["mlp_b3"].reshape(1, 1).astype(f32)           # (1, 1)

    def _full2d(a):
        # Whole-array block; same block index on both grid steps -> DMA'd once.
        return pl.BlockSpec(a.shape, lambda b: (0, 0))

    in_specs = [
        pl.BlockSpec((1, N, N), lambda b: (b, 0, 0)),          # adj (per branch)
        _full2d(w1), _full2d(b1),
        _full2d(w2), _full2d(b2),
        _full2d(mw1), _full2d(mb1),
        _full2d(mw2), _full2d(mb2),
        _full2d(mw3), _full2d(mb3),
    ]
    out_spec = pl.BlockSpec((1, N, 1), lambda b: (b, 0, 0))

    flops_branch = (
        2 * N * N * H                       # adj @ W1
        + 2 * N * H * H                     # x1 @ W2
        + 2 * N * N * H                     # adj @ support
        + 2 * (2 * N) * H * (2 * H)         # MLP linear1
        + 2 * (2 * N) * (2 * H) * (2 * H)   # MLP linear2
        + 2 * (2 * N) * (2 * H)             # final reduce
    )
    cost = pl.CostEstimate(
        flops=2 * flops_branch,
        transcendentals=2 * N,              # rsqrt per row per branch
        bytes_accessed=(adj.size * 2
                        + 2 * (w1.size + w2.size + mw1.size + mw2.size)
                        + 4 * (b1.size + b2.size + mb1.size + mb2.size
                               + mw3.size + mb3.size)
                        + 4 * 2 * N),
    )

    scores = pl.pallas_call(
        _fused_branch_kernel,
        out_shape=jax.ShapeDtypeStruct((2, N, 1), jnp.float32),
        grid=(2,),
        in_specs=in_specs,
        out_specs=out_spec,
        compiler_params=pltpu.CompilerParams(
            dimension_semantics=("parallel",),
            vmem_limit_bytes=32 * 1024 * 1024),
        cost_estimate=cost,
    )(adj, w1, b1, w2, b2, mw1, mb1, mw2, mb2, mw3, mb3)

    # torch.mul(score1, score2): tiny elementwise combine of the two branches.
    return scores[0] * scores[1]                               # (N, 1)


# ------------------------------------------------------------------ params

def init_params(key, ninput, nhid):
    """Deterministic synthetic parameter init (uniform, GCN-style scale)."""
    ks = jax.random.split(key, 10)

    def unif(k, shape, scale):
        return jax.random.uniform(k, shape, jnp.float32, -scale, scale)

    s_gc = 1.0 / (nhid ** 0.5)
    s_m1 = 1.0 / (nhid ** 0.5)
    s_m2 = 1.0 / ((2 * nhid) ** 0.5)

    p = {}
    p["gc1_w"] = unif(ks[0], (ninput, nhid), s_gc)     # GNN_Layer_Init weight
    p["gc1_b"] = unif(ks[1], (nhid,), s_gc)
    p["gc2_w"] = unif(ks[2], (nhid, nhid), s_gc)       # GNN_Layer weight
    p["gc2_b"] = unif(ks[3], (nhid,), s_gc)
    # MLP: Linear(nhid, 2*nhid), Linear(2*nhid, 2*nhid), Linear(2*nhid, 1)
    # stored as [in, out] (transposed w.r.t. torch's [out, in]).
    p["mlp_w1"] = unif(ks[4], (nhid, 2 * nhid), s_m1)
    p["mlp_b1"] = unif(ks[5], (2 * nhid,), s_m1)
    p["mlp_w2"] = unif(ks[6], (2 * nhid, 2 * nhid), s_m2)
    p["mlp_b2"] = unif(ks[7], (2 * nhid,), s_m2)
    p["mlp_w3"] = unif(ks[8], (2 * nhid, 1), s_m2)
    p["mlp_b3"] = unif(ks[9], (1,), s_m2)
    return p


# ------------------------------------------------------------------ main

if __name__ == "__main__":
    N = 64          # number of nodes; GNN_Layer_Init implies ninput == N
    NINPUT = N
    NHID = 32
    DROPOUT = 0.0   # TODO(synk): nonzero training-mode dropout not implemented

    key = jax.random.PRNGKey(0)
    kp, k1, k2 = jax.random.split(key, 3)

    params = init_params(kp, NINPUT, NHID)

    # Dense "normalized adjacency"-style inputs (PyTorch code uses sparse spmm;
    # dense equivalent here).
    a1 = jax.random.uniform(k1, (N, N), jnp.float32)
    a2 = jax.random.uniform(k2, (N, N), jnp.float32)
    adj1 = (a1 < 0.1).astype(jnp.float32) / N
    adj2 = (a2 < 0.1).astype(jnp.float32) / N

    out = jax.jit(gnn_bet1_forward)(adj1, adj2, params)
    out = jax.block_until_ready(out)

    assert out.shape == (N, 1), out.shape
    assert bool(jnp.all(jnp.isfinite(out)))
    print("KERNEL_OK")
</pallas_src>

<mosaic_0001>
module attributes {stable_mosaic.version = 11 : i64} {
  func.func @_fused_branch_kernel(%arg0: i32, %arg1: memref<1x64x64xbf16, #tpu.memory_space<vmem>>, %arg2: memref<64x32xbf16, #tpu.memory_space<vmem>>, %arg3: memref<1x32xf32, #tpu.memory_space<vmem>>, %arg4: memref<32x32xbf16, #tpu.memory_space<vmem>>, %arg5: memref<1x32xf32, #tpu.memory_space<vmem>>, %arg6: memref<32x64xbf16, #tpu.memory_space<vmem>>, %arg7: memref<1x64xf32, #tpu.memory_space<vmem>>, %arg8: memref<64x64xbf16, #tpu.memory_space<vmem>>, %arg9: memref<1x64xf32, #tpu.memory_space<vmem>>, %arg10: memref<1x64xf32, #tpu.memory_space<vmem>>, %arg11: memref<1x1xf32, #tpu.memory_space<vmem>>, %arg12: memref<1x64x1xf32, #tpu.memory_space<vmem>>) attributes {dimension_semantics = [#tpu.dimension_semantics<parallel>], iteration_bounds = array<i64: 2>, scalar_prefetch = 0 : i64, scratch_operands = 0 : i64, tpu.core_type = #tpu.core_type<tc>, window_params = [{transform_indices = @transform_0, window_bounds = array<i64: 1, 64, 64>}, {pipeline_mode = #tpu.pipeline_mode<synchronous>, transform_indices = @transform_1, window_bounds = array<i64: 64, 32>}, {pipeline_mode = #tpu.pipeline_mode<synchronous>, transform_indices = @transform_2, window_bounds = array<i64: 1, 32>}, {pipeline_mode = #tpu.pipeline_mode<synchronous>, transform_indices = @transform_3, window_bounds = array<i64: 32, 32>}, {pipeline_mode = #tpu.pipeline_mode<synchronous>, transform_indices = @transform_4, window_bounds = array<i64: 1, 32>}, {pipeline_mode = #tpu.pipeline_mode<synchronous>, transform_indices = @transform_5, window_bounds = array<i64: 32, 64>}, {pipeline_mode = #tpu.pipeline_mode<synchronous>, transform_indices = @transform_6, window_bounds = array<i64: 1, 64>}, {pipeline_mode = #tpu.pipeline_mode<synchronous>, transform_indices = @transform_7, window_bounds = array<i64: 64, 64>}, {pipeline_mode = #tpu.pipeline_mode<synchronous>, transform_indices = @transform_8, window_bounds = array<i64: 1, 64>}, {pipeline_mode = #tpu.pipeline_mode<synchronous>, transform_indices = @transform_9, window_bounds = array<i64: 1, 64>}, {pipeline_mode = #tpu.pipeline_mode<synchronous>, transform_indices = @transform_10, window_bounds = array<i64: 1, 1>}, {transform_indices = @transform_11, window_bounds = array<i64: 1, 64, 1>}]} {
    %c0 = arith.constant 0 : index
    %c0_0 = arith.constant 0 : index
    %c0_1 = arith.constant 0 : index
    %0 = vector.load %arg1[%c0, %c0_0, %c0_1] : memref<1x64x64xbf16, #tpu.memory_space<vmem>>, vector<1x64x64xbf16>
    %1 = vector.shape_cast %0 : vector<1x64x64xbf16> to vector<64x64xbf16>
    %c0_2 = arith.constant 0 : index
    %c0_3 = arith.constant 0 : index
    %2 = vector.load %arg2[%c0_2, %c0_3] : memref<64x32xbf16, #tpu.memory_space<vmem>>, vector<64x32xbf16>
    %cst = arith.constant dense<0.000000e+00> : vector<64x32xf32>
    %3 = tpu.matmul %1, %2, %cst {dimension_numbers = #tpu.dot_dimension_numbers<[1], [0], [0], [1], [0, 0, 1, 1], [], []>} : vector<64x64xbf16>, vector<64x32xbf16>, vector<64x32xf32> -> vector<64x32xf32>
    %c0_4 = arith.constant 0 : index
    %c0_5 = arith.constant 0 : index
    %4 = vector.load %arg3[%c0_4, %c0_5] : memref<1x32xf32, #tpu.memory_space<vmem>>, vector<1x32xf32>
    %5 = vector.broadcast %4 : vector<1x32xf32> to vector<64x32xf32>
    %6 = arith.addf %3, %5 : vector<64x32xf32>
    %cst_6 = arith.constant 0.000000e+00 : f32
    %7 = vector.broadcast %cst_6 : f32 to vector<64x32xf32>
    %8 = arith.maximumf %6, %7 : vector<64x32xf32>
    %9 = arith.mulf %8, %8 : vector<64x32xf32>
    %cst_7 = arith.constant dense<0.000000e+00> : vector<64xf32>
    %10 = vector.multi_reduction <add>, %9, %cst_7 [1] : vector<64x32xf32> to vector<64xf32>
    %11 = vector.shape_cast %10 : vector<64xf32> to vector<64x1xf32>
    %cst_8 = arith.constant 1.000000e-24 : f32
    %12 = vector.broadcast %cst_8 : f32 to vector<64x1xf32>
    %13 = arith.maximumf %11, %12 : vector<64x1xf32>
    %14 = math.rsqrt %13 : vector<64x1xf32>
    %15 = vector.broadcast %14 : vector<64x1xf32> to vector<64x32xf32>
    %16 = arith.mulf %8, %15 : vector<64x32xf32>
    %17 = arith.truncf %16 : vector<64x32xf32> to vector<64x32xbf16>
    %c0_9 = arith.constant 0 : index
    %c0_10 = arith.constant 0 : index
    %18 = vector.load %arg4[%c0_9, %c0_10] : memref<32x32xbf16, #tpu.memory_space<vmem>>, vector<32x32xbf16>
    %cst_11 = arith.constant dense<0.000000e+00> : vector<64x32xf32>
    %19 = tpu.matmul %17, %18, %cst_11 {dimension_numbers = #tpu.dot_dimension_numbers<[1], [0], [0], [1], [0, 0, 1, 1], [], []>} : vector<64x32xbf16>, vector<32x32xbf16>, vector<64x32xf32> -> vector<64x32xf32>
    %20 = arith.truncf %19 : vector<64x32xf32> to vector<64x32xbf16>
    %cst_12 = arith.constant dense<0.000000e+00> : vector<64x32xf32>
    %21 = tpu.matmul %1, %20, %cst_12 {dimension_numbers = #tpu.dot_dimension_numbers<[1], [0], [0], [1], [0, 0, 1, 1], [], []>} : vector<64x64xbf16>, vector<64x32xbf16>, vector<64x32xf32> -> vector<64x32xf32>
    %c0_13 = arith.constant 0 : index
    %c0_14 = arith.constant 0 : index
    %22 = vector.load %arg5[%c0_13, %c0_14] : memref<1x32xf32, #tpu.memory_space<vmem>>, vector<1x32xf32>
    %23 = vector.broadcast %22 : vector<1x32xf32> to vector<64x32xf32>
    %24 = arith.addf %21, %23 : vector<64x32xf32>
    %cst_15 = arith.constant 0.000000e+00 : f32
    %25 = vector.broadcast %cst_15 : f32 to vector<64x32xf32>
    %26 = arith.maximumf %24, %25 : vector<64x32xf32>
    %27 = arith.truncf %26 : vector<64x32xf32> to vector<64x32xbf16>
    %28 = tpu.concatenate %17, %27 in 0 : vector<64x32xbf16>, vector<64x32xbf16> -> vector<128x32xbf16>
    %c0_16 = arith.constant 0 : index
    %c0_17 = arith.constant 0 : index
    %29 = vector.load %arg6[%c0_16, %c0_17] : memref<32x64xbf16, #tpu.memory_space<vmem>>, vector<32x64xbf16>
    %cst_18 = arith.constant dense<0.000000e+00> : vector<128x64xf32>
    %30 = tpu.matmul %28, %29, %cst_18 {dimension_numbers = #tpu.dot_dimension_numbers<[1], [0], [0], [1], [0, 0, 1, 1], [], []>} : vector<128x32xbf16>, vector<32x64xbf16>, vector<128x64xf32> -> vector<128x64xf32>
    %c0_19 = arith.constant 0 : index
    %c0_20 = arith.constant 0 : index
    %31 = vector.load %arg7[%c0_19, %c0_20] : memref<1x64xf32, #tpu.memory_space<vmem>>, vector<1x64xf32>
    %32 = vector.broadcast %31 : vector<1x64xf32> to vector<128x64xf32>
    %33 = arith.addf %30, %32 : vector<128x64xf32>
    %cst_21 = arith.constant 0.000000e+00 : f32
    %34 = vector.broadcast %cst_21 : f32 to vector<128x64xf32>
    %35 = arith.maximumf %33, %34 : vector<128x64xf32>
    %36 = arith.truncf %35 : vector<128x64xf32> to vector<128x64xbf16>
    %c0_22 = arith.constant 0 : index
    %c0_23 = arith.constant 0 : index
    %37 = vector.load %arg8[%c0_22, %c0_23] : memref<64x64xbf16, #tpu.memory_space<vmem>>, vector<64x64xbf16>
    %cst_24 = arith.constant dense<0.000000e+00> : vector<128x64xf32>
    %38 = tpu.matmul %36, %37, %cst_24 {dimension_numbers = #tpu.dot_dimension_numbers<[1], [0], [0], [1], [0, 0, 1, 1], [], []>} : vector<128x64xbf16>, vector<64x64xbf16>, vector<128x64xf32> -> vector<128x64xf32>
    %c0_25 = arith.constant 0 : index
    %c0_26 = arith.constant 0 : index
    %39 = vector.load %arg9[%c0_25, %c0_26] : memref<1x64xf32, #tpu.memory_space<vmem>>, vector<1x64xf32>
    %40 = vector.broadcast %39 : vector<1x64xf32> to vector<128x64xf32>
    %41 = arith.addf %38, %40 : vector<128x64xf32>
    %cst_27 = arith.constant 0.000000e+00 : f32
    %42 = vector.broadcast %cst_27 : f32 to vector<128x64xf32>
    %43 = arith.maximumf %41, %42 : vector<128x64xf32>
    %c0_28 = arith.constant 0 : index
    %c0_29 = arith.constant 0 : index
    %44 = vector.load %arg10[%c0_28, %c0_29] : memref<1x64xf32, #tpu.memory_space<vmem>>, vector<1x64xf32>
    %45 = vector.broadcast %44 : vector<1x64xf32> to vector<128x64xf32>
    %46 = arith.mulf %43, %45 : vector<128x64xf32>
    %cst_30 = arith.constant dense<0.000000e+00> : vector<128xf32>
    %47 = vector.multi_reduction <add>, %46, %cst_30 [1] : vector<128x64xf32> to vector<128xf32>
    %48 = vector.shape_cast %47 : vector<128xf32> to vector<128x1xf32>
    %c0_31 = arith.constant 0 : index
    %c0_32 = arith.constant 0 : index
    %49 = vector.load %arg11[%c0_31, %c0_32] : memref<1x1xf32, #tpu.memory_space<vmem>>, vector<1x1xf32>
    %50 = vector.broadcast %49 : vector<1x1xf32> to vector<128x1xf32>
    %51 = arith.addf %48, %50 : vector<128x1xf32>
    %52 = vector.extract_strided_slice %51 {offsets = [0, 0], sizes = [64, 1], strides = [1, 1]} : vector<128x1xf32> to vector<64x1xf32>
    %53 = vector.extract_strided_slice %51 {offsets = [64, 0], sizes = [64, 1], strides = [1, 1]} : vector<128x1xf32> to vector<64x1xf32>
    %54 = arith.addf %52, %53 : vector<64x1xf32>
    %c0_33 = arith.constant 0 : index
    %c0_34 = arith.constant 0 : index
    %c0_35 = arith.constant 0 : index
    %55 = vector.load %arg12[%c0_33, %c0_34, %c0_35] : memref<1x64x1xf32, #tpu.memory_space<vmem>>, vector<1x64x1xf32>
    %56 = vector.shape_cast %55 : vector<1x64x1xf32> to vector<64x1xf32>
    %57 = vector.shape_cast %54 : vector<64x1xf32> to vector<1x64x1xf32>
    tpu.vector_store %arg12[%c0_33, %c0_34, %c0_35], %57 {strides = array<i32>} : memref<1x64x1xf32, #tpu.memory_space<vmem>>, vector<1x64x1xf32>,
    return
  }
  func.func @transform_0(%arg0: i32) -> (i32, i32, i32) {
    %c0_i32 = arith.constant 0 : i32
    %c0_i32_0 = arith.constant 0 : i32
    %c0_i32_1 = arith.constant 0 : i32
    return %arg0, %c0_i32, %c0_i32_0 : i32, i32, i32
  }
  func.func @transform_1(%arg0: i32) -> (i32, i32) {
    %c0_i32 = arith.constant 0 : i32
    %c0_i32_0 = arith.constant 0 : i32
    %c0_i32_1 = arith.constant 0 : i32
    return %c0_i32, %c0_i32_0 : i32, i32
  }
  func.func @transform_2(%arg0: i32) -> (i32, i32) {
    %c0_i32 = arith.constant 0 : i32
    %c0_i32_0 = arith.constant 0 : i32
    %c0_i32_1 = arith.constant 0 : i32
    return %c0_i32, %c0_i32_0 : i32, i32
  }
  func.func @transform_3(%arg0: i32) -> (i32, i32) {
    %c0_i32 = arith.constant 0 : i32
    %c0_i32_0 = arith.constant 0 : i32
    %c0_i32_1 = arith.constant 0 : i32
    return %c0_i32, %c0_i32_0 : i32, i32
  }
  func.func @transform_4(%arg0: i32) -> (i32, i32) {
    %c0_i32 = arith.constant 0 : i32
    %c0_i32_0 = arith.constant 0 : i32
    %c0_i32_1 = arith.constant 0 : i32
    return %c0_i32, %c0_i32_0 : i32, i32
  }
  func.func @transform_5(%arg0: i32) -> (i32, i32) {
    %c0_i32 = arith.constant 0 : i32
    %c0_i32_0 = arith.constant 0 : i32
    %c0_i32_1 = arith.constant 0 : i32
    return %c0_i32, %c0_i32_0 : i32, i32
  }
  func.func @transform_6(%arg0: i32) -> (i32, i32) {
    %c0_i32 = arith.constant 0 : i32
    %c0_i32_0 = arith.constant 0 : i32
    %c0_i32_1 = arith.constant 0 : i32
    return %c0_i32, %c0_i32_0 : i32, i32
  }
  func.func @transform_7(%arg0: i32) -> (i32, i32) {
    %c0_i32 = arith.constant 0 : i32
    %c0_i32_0 = arith.constant 0 : i32
    %c0_i32_1 = arith.constant 0 : i32
    return %c0_i32, %c0_i32_0 : i32, i32
  }
  func.func @transform_8(%arg0: i32) -> (i32, i32) {
    %c0_i32 = arith.constant 0 : i32
    %c0_i32_0 = arith.constant 0 : i32
    %c0_i32_1 = arith.constant 0 : i32
    return %c0_i32, %c0_i32_0 : i32, i32
  }
  func.func @transform_9(%arg0: i32) -> (i32, i32) {
    %c0_i32 = arith.constant 0 : i32
    %c0_i32_0 = arith.constant 0 : i32
    %c0_i32_1 = arith.constant 0 : i32
    return %c0_i32, %c0_i32_0 : i32, i32
  }
  func.func @transform_10(%arg0: i32) -> (i32, i32) {
    %c0_i32 = arith.constant 0 : i32
    %c0_i32_0 = arith.constant 0 : i32
    %c0_i32_1 = arith.constant 0 : i32
    return %c0_i32, %c0_i32_0 : i32, i32
  }
  func.func @transform_11(%arg0: i32) -> (i32, i32, i32) {
    %c0_i32 = arith.constant 0 : i32
    %c0_i32_0 = arith.constant 0 : i32
    %c0_i32_1 = arith.constant 0 : i32
    return %arg0, %c0_i32, %c0_i32_0 : i32, i32, i32
  }
}

</mosaic_0001>

<llo_original>
// kernel: gnn_bet1_forward.1
$region0: #{gnn_bet1_forward.1}
  #allocation0 [shape = 'u32[]', space=smem, size = 0x4, offset = 0x4, fixed_abs, tag = 'smem constant byte address 0x4 - core index']
  #allocation1 [shape = 'u32[144,128]{1,0:T(1,128)}', space=vmem, size = 0x12000, scoped, tag = 'internal scratch']
  #allocation2 [shape = 'f32[1,1]{1,0:T(1,128)S(1)}', space=vmem, size = 0x200, scoped, tag = 'scoped memory for gnn_bet1_forward.1']
  %s0 = inlined_call_operand.vmem [shape: bf16[2,64,64], index: 0, kind: input, shape index: {}]
  %s1 = inlined_call_operand.vmem [shape: bf16[64,32], index: 1, kind: input, shape index: {}]
  %s2 = inlined_call_operand.vmem [shape: f32[1,32], index: 2, kind: input, shape index: {}]
  %s3 = inlined_call_operand.vmem [shape: bf16[32,32], index: 3, kind: input, shape index: {}]
  %s4 = inlined_call_operand.vmem [shape: f32[1,32], index: 4, kind: input, shape index: {}]
  %s5 = inlined_call_operand.vmem [shape: bf16[32,64], index: 5, kind: input, shape index: {}]
  %s6 = inlined_call_operand.vmem [shape: f32[1,64], index: 6, kind: input, shape index: {}]
  %s7 = inlined_call_operand.vmem [shape: bf16[64,64], index: 7, kind: input, shape index: {}]
  %s8 = inlined_call_operand.vmem [shape: f32[1,64], index: 8, kind: input, shape index: {}]
  %s9 = inlined_call_operand.vmem [shape: f32[1,64], index: 9, kind: input, shape index: {}]
  %s10 = inlined_call_operand.<no memory space> [shape: f32[1,1], index: 10, kind: input, shape index: {}]
  %s11 = inlined_call_operand.vmem [shape: f32[2,64,1], index: 11, kind: output, shape index: {}]
  %s12 = sld [smem:[#allocation0]]
  $region77: #{gnn_bet1_forward.1} parent=0
    _
  %s14 = ssub.s32 1, %s12
  %s15 = scalar_select 0, %s14, %s12
  %v16 = vstv %s10
  %17 = vst [vmem:[#allocation2] sm:$0x1] %v16
  loop: start=0, step=1, limit=4
  $region2: #{gnn_bet1_forward.1} parent=0 // loop_pre_header
    _
  $region3: #{gnn_bet1_forward.1} parent=0 // loop_header
    %s19 = sphi 0, %s23
    %p20 = scmp.ge.s32.totalorder %s19, 4
    %s29 = sphi 0, %s31
    %s32 = sphi 0, %s29
    %s33 = sphi 0, %s32
    %s49 = sphi 0, %s33
    %s53 = sphi 0, %s53
    %s55 = sphi 0, %s53
    %s56 = sphi 0, %s55
    %s70 = sphi 0, %s56
    %s74 = sphi 0, %s74
    %s76 = sphi 0, %s74
    %s77 = sphi 0, %s76
    %s91 = sphi 0, %s77
    %s95 = sphi 0, %s95
    %s97 = sphi 0, %s95
    %s98 = sphi 0, %s97
    %s112 = sphi 0, %s98
    %s116 = sphi 0, %s116
    %s118 = sphi 0, %s116
    %s119 = sphi 0, %s118
    %s133 = sphi 0, %s119
    %s137 = sphi 0, %s137
    %s139 = sphi 0, %s137
    %s140 = sphi 0, %s139
    %s154 = sphi 0, %s140
    %s158 = sphi 0, %s158
    %s160 = sphi 0, %s158
    %s161 = sphi 0, %s160
    %s175 = sphi 0, %s161
    %s179 = sphi 0, %s179
    %s181 = sphi 0, %s179
    %s182 = sphi 0, %s181
    %s196 = sphi 0, %s182
    %s200 = sphi 0, %s200
    %s202 = sphi 0, %s200
    %s203 = sphi 0, %s202
    %s217 = sphi 0, %s203
    %s221 = sphi 0, %s221
    %s223 = sphi 0, %s221
    %s224 = sphi 0, %s223
    %s238 = sphi 0, %s224
    %s242 = sphi 0, %s242
    %s244 = sphi 0, %s242
    %s245 = sphi 0, %s244
    %s259 = sphi 0, %s245
    %s265 = sphi 0, %s267
    %s268 = sphi 0, %s265
    %s269 = sphi 0, %s268
    %s285 = sphi 0, %s269
  $region4: #{gnn_bet1_forward.1} parent=0 // loop_header_branch
    %22 = sbr.rel (%p20) target = $region8
  $region5: #{gnn_bet1_forward.1} parent=0 // loop_body
    %s24 = ssub.s32 %s19, 1
    %s25 = ssub.s32 %s19, 2
    %s26 = sadd.s32 %s19, 1
    %s27 = ssub.s32 %s19, %s26
    %p28 = scmp.eq.s32.totalorder %s27, 0
    %s30 = sadd.s32 %s29, 1
    %s31 = scalar_select %p28, %s29, %s30
    %p34 = pneg %p28
    %p35 = scmp.eq.s32.totalorder %s19, 1
    %p36 = por %p34, %p35
    %p37 = scmp.ne.s32.totalorder %s29, %s32
    %p38 = scmp.eq.s32.totalorder %s19, 0
    %p39 = por %p37, %p38
    %p40 = scmp.ne.s32.totalorder %s29, %s32
    %p41 = scmp.eq.s32.totalorder %s24, 1
    %p42 = por %p40, %p41
    %p43 = scmp.ne.s32.totalorder %s32, %s33
    %p44 = scmp.eq.s32.totalorder %s24, 0
    %p45 = por %p43, %p44
    %p46 = scmp.ne.s32.totalorder %s32, %s33
    %p47 = scmp.eq.s32.totalorder %s25, 1
    %p48 = por %p46, %p47
    %p50 = scmp.ne.s32.totalorder %s33, %s49
    %p51 = scmp.eq.s32.totalorder %s25, 0
    %p52 = por %p50, %p51
    %s54 = sadd.s32 %s53, 1
    %p57 = scmp.eq.s32.totalorder %s19, 1
    %p58 = scmp.ne.s32.totalorder %s53, %s55
    %p59 = scmp.eq.s32.totalorder %s19, 0
    %p60 = por %p58, %p59
    %p61 = scmp.ne.s32.totalorder %s53, %s55
    %p62 = scmp.eq.s32.totalorder %s24, 1
    %p63 = por %p61, %p62
    %p64 = scmp.ne.s32.totalorder %s55, %s56
    %p65 = scmp.eq.s32.totalorder %s24, 0
    %p66 = por %p64, %p65
    %p67 = scmp.ne.s32.totalorder %s55, %s56
    %p68 = scmp.eq.s32.totalorder %s25, 1
    %p69 = por %p67, %p68
    %p71 = scmp.ne.s32.totalorder %s56, %s70
    %p72 = scmp.eq.s32.totalorder %s25, 0
    %p73 = por %p71, %p72
    %s75 = sadd.s32 %s74, 1
    %p78 = scmp.eq.s32.totalorder %s19, 1
    %p79 = scmp.ne.s32.totalorder %s74, %s76
    %p80 = scmp.eq.s32.totalorder %s19, 0
    %p81 = por %p79, %p80
    %p82 = scmp.ne.s32.totalorder %s74, %s76
    %p83 = scmp.eq.s32.totalorder %s24, 1
    %p84 = por %p82, %p83
    %p85 = scmp.ne.s32.totalorder %s76, %s77
    %p86 = scmp.eq.s32.totalorder %s24, 0
    %p87 = por %p85, %p86
    %p88 = scmp.ne.s32.totalorder %s76, %s77
    %p89 = scmp.eq.s32.totalorder %s25, 1
    %p90 = por %p88, %p89
    %p92 = scmp.ne.s32.totalorder %s77, %s91
    %p93 = scmp.eq.s32.totalorder %s25, 0
    %p94 = por %p92, %p93
    %s96 = sadd.s32 %s95, 1
    %p99 = scmp.eq.s32.totalorder %s19, 1
    %p100 = scmp.ne.s32.totalorder %s95, %s97
    %p101 = scmp.eq.s32.totalorder %s19, 0
    %p102 = por %p100, %p101
    %p103 = scmp.ne.s32.totalorder %s95, %s97
    %p104 = scmp.eq.s32.totalorder %s24, 1
    %p105 = por %p103, %p104
    %p106 = scmp.ne.s32.totalorder %s97, %s98
    %p107 = scmp.eq.s32.totalorder %s24, 0
    %p108 = por %p106, %p107
    %p109 = scmp.ne.s32.totalorder %s97, %s98
    %p110 = scmp.eq.s32.totalorder %s25, 1
    %p111 = por %p109, %p110
    %p113 = scmp.ne.s32.totalorder %s98, %s112
    %p114 = scmp.eq.s32.totalorder %s25, 0
    %p115 = por %p113, %p114
    %s117 = sadd.s32 %s116, 1
    %p120 = scmp.eq.s32.totalorder %s19, 1
    %p121 = scmp.ne.s32.totalorder %s116, %s118
    %p122 = scmp.eq.s32.totalorder %s19, 0
    %p123 = por %p121, %p122
    %p124 = scmp.ne.s32.totalorder %s116, %s118
    %p125 = scmp.eq.s32.totalorder %s24, 1
    %p126 = por %p124, %p125
    %p127 = scmp.ne.s32.totalorder %s118, %s119
    %p128 = scmp.eq.s32.totalorder %s24, 0
    %p129 = por %p127, %p128
    %p130 = scmp.ne.s32.totalorder %s118, %s119
    %p131 = scmp.eq.s32.totalorder %s25, 1
    %p132 = por %p130, %p131
    %p134 = scmp.ne.s32.totalorder %s119, %s133
    %p135 = scmp.eq.s32.totalorder %s25, 0
    %p136 = por %p134, %p135
    %s138 = sadd.s32 %s137, 1
    %p141 = scmp.eq.s32.totalorder %s19, 1
    %p142 = scmp.ne.s32.totalorder %s137, %s139
    %p143 = scmp.eq.s32.totalorder %s19, 0
    %p144 = por %p142, %p143
    %p145 = scmp.ne.s32.totalorder %s137, %s139
    %p146 = scmp.eq.s32.totalorder %s24, 1
    %p147 = por %p145, %p146
    %p148 = scmp.ne.s32.totalorder %s139, %s140
    %p149 = scmp.eq.s32.totalorder %s24, 0
    %p150 = por %p148, %p149
    %p151 = scmp.ne.s32.totalorder %s139, %s140
    %p152 = scmp.eq.s32.totalorder %s25, 1
    %p153 = por %p151, %p152
    %p155 = scmp.ne.s32.totalorder %s140, %s154
    %p156 = scmp.eq.s32.totalorder %s25, 0
    %p157 = por %p155, %p156
    %s159 = sadd.s32 %s158, 1
    %p162 = scmp.eq.s32.totalorder %s19, 1
    %p163 = scmp.ne.s32.totalorder %s158, %s160
    %p164 = scmp.eq.s32.totalorder %s19, 0
    %p165 = por %p163, %p164
    %p166 = scmp.ne.s32.totalorder %s158, %s160
    %p167 = scmp.eq.s32.totalorder %s24, 1
    %p168 = por %p166, %p167
    %p169 = scmp.ne.s32.totalorder %s160, %s161
    %p170 = scmp.eq.s32.totalorder %s24, 0
    %p171 = por %p169, %p170
    %p172 = scmp.ne.s32.totalorder %s160, %s161
    %p173 = scmp.eq.s32.totalorder %s25, 1
    %p174 = por %p172, %p173
    %p176 = scmp.ne.s32.totalorder %s161, %s175
    %p177 = scmp.eq.s32.totalorder %s25, 0
    %p178 = por %p176, %p177
    %s180 = sadd.s32 %s179, 1
    %p183 = scmp.eq.s32.totalorder %s19, 1
    %p184 = scmp.ne.s32.totalorder %s179, %s181
    %p185 = scmp.eq.s32.totalorder %s19, 0
    %p186 = por %p184, %p185
    %p187 = scmp.ne.s32.totalorder %s179, %s181
    %p188 = scmp.eq.s32.totalorder %s24, 1
    %p189 = por %p187, %p188
    %p190 = scmp.ne.s32.totalorder %s181, %s182
    %p191 = scmp.eq.s32.totalorder %s24, 0
    %p192 = por %p190, %p191
    %p193 = scmp.ne.s32.totalorder %s181, %s182
    %p194 = scmp.eq.s32.totalorder %s25, 1
    %p195 = por %p193, %p194
    %p197 = scmp.ne.s32.totalorder %s182, %s196
    %p198 = scmp.eq.s32.totalorder %s25, 0
    %p199 = por %p197, %p198
    %s201 = sadd.s32 %s200, 1
    %p204 = scmp.eq.s32.totalorder %s19, 1
    %p205 = scmp.ne.s32.totalorder %s200, %s202
    %p206 = scmp.eq.s32.totalorder %s19, 0
    %p207 = por %p205, %p206
    %p208 = scmp.ne.s32.totalorder %s200, %s202
    %p209 = scmp.eq.s32.totalorder %s24, 1
    %p210 = por %p208, %p209
    %p211 = scmp.ne.s32.totalorder %s202, %s203
    %p212 = scmp.eq.s32.totalorder %s24, 0
    %p213 = por %p211, %p212
    %p214 = scmp.ne.s32.totalorder %s202, %s203
    %p215 = scmp.eq.s32.totalorder %s25, 1
    %p216 = por %p214, %p215
    %p218 = scmp.ne.s32.totalorder %s203, %s217
    %p219 = scmp.eq.s32.totalorder %s25, 0
    %p220 = por %p218, %p219
    %s222 = sadd.s32 %s221, 1
    %p225 = scmp.eq.s32.totalorder %s19, 1
    %p226 = scmp.ne.s32.totalorder %s221, %s223
    %p227 = scmp.eq.s32.totalorder %s19, 0
    %p228 = por %p226, %p227
    %p229 = scmp.ne.s32.totalorder %s221, %s223
    %p230 = scmp.eq.s32.totalorder %s24, 1
    %p231 = por %p229, %p230
    %p232 = scmp.ne.s32.totalorder %s223, %s224
    %p233 = scmp.eq.s32.totalorder %s24, 0
    %p234 = por %p232, %p233
    %p235 = scmp.ne.s32.totalorder %s223, %s224
    %p236 = scmp.eq.s32.totalorder %s25, 1
    %p237 = por %p235, %p236
    %p239 = scmp.ne.s32.totalorder %s224, %s238
    %p240 = scmp.eq.s32.totalorder %s25, 0
    %p241 = por %p239, %p240
    %s243 = sadd.s32 %s242, 1
    %p246 = scmp.eq.s32.totalorder %s19, 1
    %p247 = scmp.ne.s32.totalorder %s242, %s244
    %p248 = scmp.eq.s32.totalorder %s19, 0
    %p249 = por %p247, %p248
    %p250 = scmp.ne.s32.totalorder %s242, %s244
    %p251 = scmp.eq.s32.totalorder %s24, 1
    %p252 = por %p250, %p251
    %p253 = scmp.ne.s32.totalorder %s244, %s245
    %p254 = scmp.eq.s32.totalorder %s24, 0
    %p255 = por %p253, %p254
    %p256 = scmp.ne.s32.totalorder %s244, %s245
    %p257 = scmp.eq.s32.totalorder %s25, 1
    %p258 = por %p256, %p257
    %p260 = scmp.ne.s32.totalorder %s245, %s259
    %p261 = scmp.eq.s32.totalorder %s25, 0
    %p262 = por %p260, %p261
    %s263 = ssub.s32 %s19, %s26
    %p264 = scmp.eq.s32.totalorder %s263, 0
    %s266 = sadd.s32 %s265, 1
    %s267 = scalar_select %p264, %s265, %s266
    %p270 = pneg %p264
    %p271 = scmp.eq.s32.totalorder %s19, 1
    %p272 = por %p270, %p271
    %p273 = scmp.ne.s32.totalorder %s265, %s268
    %p274 = scmp.eq.s32.totalorder %s19, 0
    %p275 = por %p273, %p274
    %p276 = scmp.ne.s32.totalorder %s265, %s268
    %p277 = scmp.eq.s32.totalorder %s24, 1
    %p278 = por %p276, %p277
    %p279 = scmp.ne.s32.totalorder %s268, %s269
    %p280 = scmp.eq.s32.totalorder %s24, 0
    %p281 = por %p279, %p280
    %p282 = scmp.ne.s32.totalorder %s268, %s269
    %p283 = scmp.eq.s32.totalorder %s25, 1
    %p284 = por %p282, %p283
    %p286 = scmp.ne.s32.totalorder %s269, %s285
    %p287 = scmp.eq.s32.totalorder %s25, 0
    %p288 = por %p286, %p287
    %p289 = scmp.le.s32.totalorder 1, %s19
    %p290 = scmp.lt.s32.totalorder %s19, 3
    %p291 = pnand %p289, %p290
    %p292 = pneg %p291
    // Predicated region
    $region9: #{gnn_bet1_forward.1} parent=5 // pred_check
      _
    $region10: #{gnn_bet1_forward.1} parent=5 // pred_check_branch
      %294 = sbr.rel (%p291) target = $region12
    $region11: #{gnn_bet1_forward.1} parent=5 // pred_region
      %s295 = ssub.s32 %s19, 1
      // Predicated region
      $region13: #{gnn_bet1_forward.1} parent=11 // pred_check
        %p296 = pneg %p66
      $region14: #{gnn_bet1_forward.1} parent=11 // pred_check_branch
        %298 = sbr.rel (%p296) target = $region16
      $region15: #{gnn_bet1_forward.1} parent=11 // pred_region
        _
      $region16: #{gnn_bet1_forward.1} parent=11 // pred_fallthru
        _
      // Predicated region
      $region17: #{gnn_bet1_forward.1} parent=11 // pred_check
        %p299 = pneg %p87
      $region18: #{gnn_bet1_forward.1} parent=11 // pred_check_branch
        %301 = sbr.rel (%p299) target = $region20
      $region19: #{gnn_bet1_forward.1} parent=11 // pred_region
        _
      $region20: #{gnn_bet1_forward.1} parent=11 // pred_fallthru
        _
      // Predicated region
      $region21: #{gnn_bet1_forward.1} parent=11 // pred_check
        %p302 = pneg %p108
      $region22: #{gnn_bet1_forward.1} parent=11 // pred_check_branch
        %304 = sbr.rel (%p302) target = $region24
      $region23: #{gnn_bet1_forward.1} parent=11 // pred_region
        _
      $region24: #{gnn_bet1_forward.1} parent=11 // pred_fallthru
        _
      // Predicated region
      $region25: #{gnn_bet1_forward.1} parent=11 // pred_check
        %p305 = pneg %p129
      $region26: #{gnn_bet1_forward.1} parent=11 // pred_check_branch
        %307 = sbr.rel (%p305) target = $region28
      $region27: #{gnn_bet1_forward.1} parent=11 // pred_region
        _
      $region28: #{gnn_bet1_forward.1} parent=11 // pred_fallthru
        _
      // Predicated region
      $region29: #{gnn_bet1_forward.1} parent=11 // pred_check
        %p308 = pneg %p150
      $region30: #{gnn_bet1_forward.1} parent=11 // pred_check_branch
        %310 = sbr.rel (%p308) target = $region32
      $region31: #{gnn_bet1_forward.1} parent=11 // pred_region
        _
      $region32: #{gnn_bet1_forward.1} parent=11 // pred_fallthru
        _
      // Predicated region
      $region33: #{gnn_bet1_forward.1} parent=11 // pred_check
        %p311 = pneg %p171
      $region34: #{gnn_bet1_forward.1} parent=11 // pred_check_branch
        %313 = sbr.rel (%p311) target = $region36
      $region35: #{gnn_bet1_forward.1} parent=11 // pred_region
        _
      $region36: #{gnn_bet1_forward.1} parent=11 // pred_fallthru
        _
      // Predicated region
      $region37: #{gnn_bet1_forward.1} parent=11 // pred_check
        %p314 = pneg %p192
      $region38: #{gnn_bet1_forward.1} parent=11 // pred_check_branch
        %316 = sbr.rel (%p314) target = $region40
      $region39: #{gnn_bet1_forward.1} parent=11 // pred_region
        _
      $region40: #{gnn_bet1_forward.1} parent=11 // pred_fallthru
        _
      // Predicated region
      $region41: #{gnn_bet1_forward.1} parent=11 // pred_check
        %p317 = pneg %p213
      $region42: #{gnn_bet1_forward.1} parent=11 // pred_check_branch
        %319 = sbr.rel (%p317) target = $region44
      $region43: #{gnn_bet1_forward.1} parent=11 // pred_region
        _
      $region44: #{gnn_bet1_forward.1} parent=11 // pred_fallthru
        _
      // Predicated region
      $region45: #{gnn_bet1_forward.1} parent=11 // pred_check
        %p320 = pneg %p234
      $region46: #{gnn_bet1_forward.1} parent=11 // pred_check_branch
        %322 = sbr.rel (%p320) target = $region48
      $region47: #{gnn_bet1_forward.1} parent=11 // pred_region
        _
      $region48: #{gnn_bet1_forward.1} parent=11 // pred_fallthru
        _
      // Predicated region
      $region49: #{gnn_bet1_forward.1} parent=11 // pred_check
        %p323 = pneg %p255
      $region50: #{gnn_bet1_forward.1} parent=11 // pred_check_branch
        %325 = sbr.rel (%p323) target = $region52
      $region51: #{gnn_bet1_forward.1} parent=11 // pred_region
        _
      $region52: #{gnn_bet1_forward.1} parent=11 // pred_fallthru
        _
    $region12: #{gnn_bet1_forward.1} parent=5 // pred_fallthru
      _
    %p326 = scmp.lt.s32.totalorder %s19, 2
    // Predicated region
    $region53: #{gnn_bet1_forward.1} parent=5 // pred_check
      %p327 = pneg %p326
    $region54: #{gnn_bet1_forward.1} parent=5 // pred_check_branch
      %329 = sbr.rel (%p327) target = $region56
    $region55: #{gnn_bet1_forward.1} parent=5 // pred_region
      // Predicated region
      $region57: #{gnn_bet1_forward.1} parent=55 // pred_check
        %p330 = pneg %p39
      $region58: #{gnn_bet1_forward.1} parent=55 // pred_check_branch
        %332 = sbr.rel (%p330) target = $region60
      $region59: #{gnn_bet1_forward.1} parent=55 // pred_region
        %p333 = scmp.lt.s32.totalorder %s19, 1
        %s334 = scalar_select %p333, %s19, 1
        %s335 = smul.addr %s334, 8
        %s336 = smul.addr %s335, 4
        %s337 = scalar_lea.vmem %s0, %s336
      $region60: #{gnn_bet1_forward.1} parent=55 // pred_fallthru
        _
    $region56: #{gnn_bet1_forward.1} parent=5 // pred_fallthru
      _
    %p338 = scmp.le.s32.totalorder 1, %s19
    %p339 = scmp.lt.s32.totalorder %s19, 3
    %p340 = pnand %p338, %p339
    %p341 = pneg %p340
    // Predicated region
    $region61: #{gnn_bet1_forward.1} parent=5 // pred_check
      _
    $region62: #{gnn_bet1_forward.1} parent=5 // pred_check_branch
      %343 = sbr.rel (%p340) target = $region64
    $region63: #{gnn_bet1_forward.1} parent=5 // pred_region
      %s344 = ssub.s32 %s19, 1
      %p345 = scmp.lt.s32.totalorder %s24, 1
      %s346 = scalar_select %p345, %s24, 1
      %s347 = smul.addr %s346, 8
      %s348 = smul.addr %s347, 4
      %s349 = scalar_lea.vmem %s0, %s348
      %p350 = pneg %p45
      %p351 = pneg %p42
      %p352 = pneg %p66
      %p353 = pneg %p63
      %p354 = pneg %p87
      %p355 = pneg %p84
      %p356 = pneg %p108
      %p357 = pneg %p105
      %p358 = pneg %p129
      %p359 = pneg %p126
      %p360 = pneg %p150
      %p361 = pneg %p147
      %p362 = pneg %p171
      %p363 = pneg %p168
      %p364 = pneg %p192
      %p365 = pneg %p189
      %p366 = pneg %p213
      %p367 = pneg %p210
      %p368 = pneg %p234
      %p369 = pneg %p231
      %p370 = pneg %p255
      %p371 = pneg %p252
      %p372 = pneg %p281
      %p373 = pneg %p278
      %p374 = scmp.lt.s32.totalorder %s24, 1
      %s375 = scalar_select %p374, %s24, 1
      %s376 = smul.addr %s375, 8
      %s377 = smul.addr %s376, 8
      %s378 = scalar_lea.vmem %s11, %s377
      %p379 = scmp.lt.s32.totalorder %s24, 1
      %s380 = scalar_select %p379, %s24, 1
      %s381 = smul.addr %s380, 8
      %s382 = smul.addr %s381, 4
      %s383 = scalar_lea.vmem %s0, %s382
      %p384 = scmp.lt.s32.totalorder %s24, 1
      %s385 = scalar_select %p384, %s24, 1
      %s386 = smul.addr %s385, 8
      %s387 = smul.addr %s386, 8
      %s388 = scalar_lea.vmem %s11, %s387
      %v390 = vld [vmem:[%s383] sm:$0xf]
      %v391 = vld [vmem:[%s383 + $0x4] sm:$0xf]
      %v392 = vld [vmem:[%s383 + $0x8] sm:$0xf]
      %v393 = vld [vmem:[%s383 + $0xc] sm:$0xf]
      %v394 = vld [vmem:[%s383 + $0x10] sm:$0xf]
      %v395 = vld [vmem:[%s383 + $0x14] sm:$0xf]
      %v396 = vld [vmem:[%s383 + $0x18] sm:$0xf]
      %v397 = vld [vmem:[%s383 + $0x1c] sm:$0xf]
      %v398 = vld [vmem:[%s1] sm:$0xf]
      %v399 = vld [vmem:[%s1 + $0x4] sm:$0xf]
      %v400 = vld [vmem:[%s1 + $0x8] sm:$0xf]
      %v401 = vld [vmem:[%s1 + $0xc] sm:$0xf]
      %v402 = vld [vmem:[%s1 + $0x10] sm:$0xf]
      %v403 = vld [vmem:[%s1 + $0x14] sm:$0xf]
      %v404 = vld [vmem:[%s1 + $0x18] sm:$0xf]
      %v405 = vld [vmem:[%s1 + $0x1c] sm:$0xf]
      %v406 = vld [vmem:[%s2] sm:$0x1]
      %v408 = vlaneseq
      %v409 = vshrl.u32 %v408, 7
      %v410 = vsub.s32 0, %v409
      %v411 = vrot.slane %v406, %v410
      %v421 = vunpack.c.l.b16 %v390
      %v422 = vunpack.c.l.b16 %v391
      %v423 = vunpack.c.l.b16 %v392
      %v424 = vunpack.c.l.b16 %v393
      %v425 = vunpack.c.l.b16 %v394
      %v426 = vunpack.c.l.b16 %v395
      %v427 = vunpack.c.l.b16 %v396
      %v428 = vunpack.c.l.b16 %v397
      %v429 = vpack.c.b16 %v422, %v421
      %v430 = vpack.c.b16 %v424, %v423
      %v431 = vpack.c.b16 %v426, %v425
      %v432 = vpack.c.b16 %v428, %v427
      %v441 = vunpack.c.l.b16 %v398
      %v442 = vunpack.c.l.b16 %v399
      %v443 = vunpack.c.l.b16 %v400
      %v444 = vunpack.c.l.b16 %v401
      %v445 = vunpack.c.l.b16 %v402
      %v446 = vunpack.c.l.b16 %v403
      %v447 = vunpack.c.l.b16 %v404
      %v448 = vunpack.c.l.b16 %v405
      %v449 = vpack.c.b16 %v442, %v441
      %v450 = vpack.c.b16 %v444, %v443
      %v451 = vpack.c.b16 %v446, %v445
      %v452 = vpack.c.b16 %v448, %v447
      %vm457 = vcmask 523264
      %v459 = vsel %vm457, %v429, 0
      %v462 = vsel %vm457, %v430, 0
      %v465 = vsel %vm457, %v431, 0
      %v468 = vsel %vm457, %v432, 0
      %470 = vmatprep.subr.bf16.mxu0 0
      %471 = vmatpush1.bf16.msra.mxu0 %v449
      %472 = vmatprep.subr.bf16.mxu0 0
      %473 = vmatpush1.bf16.msra.mxu0 %v450
      %474 = vmatprep.subr.bf16.mxu0 0
      %475 = vmatpush1.bf16.msra.mxu0 %v451
      %476 = vmatprep.subr.bf16.mxu0 0
      %477 = vmatpush1.bf16.msra.mxu0 %v452
      %478 = vmatprep.subr.bf16.mxu0 0
      %479 = vmatpush1.bf16.msra.mxu0 0
      %480 = vmatprep.subr.bf16.mxu0 0
      %481 = vmatpush1.bf16.msra.mxu0 0
      %482 = vmatprep.subr.bf16.mxu0 0
      %483 = vmatpush1.bf16.msra.mxu0 0
      %484 = vmatprep.subr.bf16.mxu0 0
      %485 = vmatpush1.bf16.msra.mxu0 0
      %486 = vmatprep.subr.bf16.mxu0 0
      %487 = vmatpush1.bf16.msra.mxu0 0
      %488 = vmatprep.subr.bf16.mxu0 0
      %489 = vmatpush1.bf16.msra.mxu0 0
      %490 = vmatprep.subr.bf16.mxu0 0
      %491 = vmatpush1.bf16.msra.mxu0 0
      %492 = vmatprep.subr.bf16.mxu0 0
      %493 = vmatpush1.bf16.msra.mxu0 0
      %494 = vmatprep.subr.bf16.mxu0 0
      %495 = vmatpush1.bf16.msra.mxu0 0
      %496 = vmatprep.subr.bf16.mxu0 0
      %497 = vmatpush1.bf16.msra.mxu0 0
      %498 = vmatprep.subr.bf16.mxu0 0
      %499 = vmatpush1.bf16.msra.mxu0 0
      %500 = vmatprep.subr.bf16.mxu0 0
      %501 = vmatpush1.bf16.msra.mxu0 0
      %502 = vmatprep.mubr.bf16.mxu0 0
      %503 = vmatmul.mubr.bf16.gmra.mrb[0].mxu0 %v459
      %v504 = vpop.f32.mrb[0].mxu0
      %v505 = vadd.f32 %v411, %v504
      %v506 = vpop.f32.mrb[0].mxu0
      %v507 = vpop.f32.mrb[0].mxu0
      %v508 = vadd.f32 %v411, %v507
      %v509 = vpop.f32.mrb[0].mxu0
      %510 = vmatprep.mubr.bf16.mxu0 0
      %511 = vmatmul.mubr.bf16.gmra.mrb[0].mxu0 %v462
      %v512 = vpop.f32.mrb[0].mxu0
      %v513 = vadd.f32 %v411, %v512
      %v514 = vpop.f32.mrb[0].mxu0
      %v515 = vpop.f32.mrb[0].mxu0
      %v516 = vadd.f32 %v411, %v515
      %v517 = vpop.f32.mrb[0].mxu0
      %518 = vmatprep.mubr.bf16.mxu0 0
      %519 = vmatmul.mubr.bf16.gmra.mrb[0].mxu0 %v465
      %v520 = vpop.f32.mrb[0].mxu0
      %v521 = vadd.f32 %v411, %v520
      %v522 = vpop.f32.mrb[0].mxu0
      %v523 = vpop.f32.mrb[0].mxu0
      %v524 = vadd.f32 %v411, %v523
      %v525 = vpop.f32.mrb[0].mxu0
      %526 = vmatprep.mubr.bf16.mxu0 0
      %527 = vmatmul.mubr.bf16.gmra.mrb[0].mxu0 %v468
      %v528 = vpop.f32.mrb[0].mxu0
      %v529 = vadd.f32 %v411, %v528
      %v530 = vpop.f32.mrb[0].mxu0
      %v531 = vpop.f32.mrb[0].mxu0
      %v532 = vadd.f32 %v411, %v531
      %v533 = vpop.f32.mrb[0].mxu0
      %534 = vdwg.mxu0
      %v535 = vmax.f32 %v505, 0.0
      %v536 = vmax.f32 %v508, 0.0
      %v537 = vmax.f32 %v513, 0.0
      %v538 = vmax.f32 %v516, 0.0
      %v539 = vmax.f32 %v521, 0.0
      %v540 = vmax.f32 %v524, 0.0
      %v541 = vmax.f32 %v529, 0.0
      %v542 = vmax.f32 %v532, 0.0
      %v543 = vmul.f32 %v535, %v535
      %v544 = vmul.f32 %v536, %v536
      %v545 = vmul.f32 %v537, %v537
      %v546 = vmul.f32 %v538, %v538
      %v547 = vmul.f32 %v539, %v539
      %v548 = vmul.f32 %v540, %v540
      %v549 = vmul.f32 %v541, %v541
      %v550 = vmul.f32 %v542, %v542
      %vm551 = vcmask 261120
      %v552 = vsel %vm551, %v543, 0.0
      %553 = vadd.xlane.f32.xlu0 %v552
      %v554 = vpop.xlane.xlu0 %553
      %v555 = vsel %vm551, %v544, 0.0
      %556 = vadd.xlane.f32.xlu0 %v555
      %v557 = vpop.xlane.xlu0 %556
      %v558 = vsel %vm551, %v545, 0.0
      %559 = vadd.xlane.f32.xlu0 %v558
      %v560 = vpop.xlane.xlu0 %559
      %v561 = vsel %vm551, %v546, 0.0
      %562 = vadd.xlane.f32.xlu0 %v561
      %v563 = vpop.xlane.xlu0 %562
      %v564 = vsel %vm551, %v547, 0.0
      %565 = vadd.xlane.f32.xlu0 %v564
      %v566 = vpop.xlane.xlu0 %565
      %v567 = vsel %vm551, %v548, 0.0
      %568 = vadd.xlane.f32.xlu0 %v567
      %v569 = vpop.xlane.xlu0 %568
      %v570 = vsel %vm551, %v549, 0.0
      %571 = vadd.xlane.f32.xlu0 %v570
      %v572 = vpop.xlane.xlu0 %571
      %v573 = vsel %vm551, %v550, 0.0
      %574 = vadd.xlane.f32.xlu0 %v573
      %v575 = vpop.xlane.xlu0 %574
      %v576 = vmax.f32 %v554, 1e-24
      %v577 = vmax.f32 %v557, 1e-24
      %v578 = vmax.f32 %v560, 1e-24
      %v579 = vmax.f32 %v563, 1e-24
      %v580 = vmax.f32 %v566, 1e-24
      %v581 = vmax.f32 %v569, 1e-24
      %v582 = vmax.f32 %v572, 1e-24
      %v583 = vmax.f32 %v575, 1e-24
      %v584 = vrsqrt.pop %v576
      %v585 = vrsqrt.pop %v577
      %v586 = vrsqrt.pop %v578
      %v587 = vrsqrt.pop %v579
      %v588 = vrsqrt.pop %v580
      %v589 = vrsqrt.pop %v581
      %v590 = vrsqrt.pop %v582
      %v591 = vrsqrt.pop %v583
      %v592 = vmul.f32 %v535, %v584
      %v593 = vmul.f32 %v536, %v585
      %v594 = vmul.f32 %v537, %v586
      %v595 = vmul.f32 %v538, %v587
      %v596 = vmul.f32 %v539, %v588
      %v597 = vmul.f32 %v540, %v589
      %v598 = vmul.f32 %v541, %v590
      %v599 = vmul.f32 %v542, %v591
      %v600 = vpack.c.bf16 %v593, %v592
      %v601 = vpack.c.bf16 %v595, %v594
      %v602 = vpack.c.bf16 %v597, %v596
      %v603 = vpack.c.bf16 %v599, %v598
      %v604 = vld [vmem:[%s3] sm:$0xf]
      %v605 = vld [vmem:[%s3 + $0x4] sm:$0xf]
      %v606 = vld [vmem:[%s3 + $0x8] sm:$0xf]
      %v607 = vld [vmem:[%s3 + $0xc] sm:$0xf]
      %v612 = vunpack.c.l.b16 %v604
      %v613 = vunpack.c.l.b16 %v605
      %v614 = vunpack.c.l.b16 %v606
      %v615 = vunpack.c.l.b16 %v607
      %v616 = vpack.c.b16 %v613, %v612
      %v617 = vpack.c.b16 %v615, %v614
      %v621 = vsel %vm551, %v600, 0
      %v624 = vsel %vm551, %v601, 0
      %v627 = vsel %vm551, %v602, 0
      %v630 = vsel %vm551, %v603, 0
      %632 = vmatprep.subr.bf16.mxu0 0
      %633 = vmatpush1.bf16.msra.mxu0 %v616
      %634 = vmatprep.subr.bf16.mxu0 0
      %635 = vmatpush1.bf16.msra.mxu0 %v617
      %636 = vmatprep.subr.bf16.mxu0 0
      %637 = vmatpush1.bf16.msra.mxu0 0
      %638 = vmatprep.subr.bf16.mxu0 0
      %639 = vmatpush1.bf16.msra.mxu0 0
      %640 = vmatprep.subr.bf16.mxu0 0
      %641 = vmatpush1.bf16.msra.mxu0 0
      %642 = vmatprep.subr.bf16.mxu0 0
      %643 = vmatpush1.bf16.msra.mxu0 0
      %644 = vmatprep.subr.bf16.mxu0 0
      %645 = vmatpush1.bf16.msra.mxu0 0
      %646 = vmatprep.subr.bf16.mxu0 0
      %647 = vmatpush1.bf16.msra.mxu0 0
      %648 = vmatprep.subr.bf16.mxu0 0
      %649 = vmatpush1.bf16.msra.mxu0 0
      %650 = vmatprep.subr.bf16.mxu0 0
      %651 = vmatpush1.bf16.msra.mxu0 0
      %652 = vmatprep.subr.bf16.mxu0 0
      %653 = vmatpush1.bf16.msra.mxu0 0
      %654 = vmatprep.subr.bf16.mxu0 0
      %655 = vmatpush1.bf16.msra.mxu0 0
      %656 = vmatprep.subr.bf16.mxu0 0
      %657 = vmatpush1.bf16.msra.mxu0 0
      %658 = vmatprep.subr.bf16.mxu0 0
      %659 = vmatpush1.bf16.msra.mxu0 0
      %660 = vmatprep.subr.bf16.mxu0 0
      %661 = vmatpush1.bf16.msra.mxu0 0
      %662 = vmatprep.subr.bf16.mxu0 0
      %663 = vmatpush1.bf16.msra.mxu0 0
      %664 = vmatprep.mubr.bf16.mxu0 0
      %665 = vmatmul.mubr.bf16.gmra.mrb[0].mxu0 %v621
      %v666 = vpop.f32.mrb[0].mxu0
      %v667 = vadd.f32 0.0, %v666
      %v668 = vpop.f32.mrb[0].mxu0
      %v669 = vpop.f32.mrb[0].mxu0
      %v670 = vadd.f32 0.0, %v669
      %v671 = vpop.f32.mrb[0].mxu0
      %672 = vmatprep.mubr.bf16.mxu0 0
      %673 = vmatmul.mubr.bf16.gmra.mrb[0].mxu0 %v624
      %v674 = vpop.f32.mrb[0].mxu0
      %v675 = vadd.f32 0.0, %v674
      %v676 = vpop.f32.mrb[0].mxu0
      %v677 = vpop.f32.mrb[0].mxu0
      %v678 = vadd.f32 0.0, %v677
      %v679 = vpop.f32.mrb[0].mxu0
      %680 = vmatprep.mubr.bf16.mxu0 0
      %681 = vmatmul.mubr.bf16.gmra.mrb[0].mxu0 %v627
      %v682 = vpop.f32.mrb[0].mxu0
      %v683 = vadd.f32 0.0, %v682
      %v684 = vpop.f32.mrb[0].mxu0
      %v685 = vpop.f32.mrb[0].mxu0
      %v686 = vadd.f32 0.0, %v685
      %v687 = vpop.f32.mrb[0].mxu0
      %688 = vmatprep.mubr.bf16.mxu0 0
      %689 = vmatmul.mubr.bf16.gmra.mrb[0].mxu0 %v630
      %v690 = vpop.f32.mrb[0].mxu0
      %v691 = vadd.f32 0.0, %v690
      %v692 = vpop.f32.mrb[0].mxu0
      %v693 = vpop.f32.mrb[0].mxu0
      %v694 = vadd.f32 0.0, %v693
      %v695 = vpop.f32.mrb[0].mxu0
      %696 = vdwg.mxu0
      %v697 = vpack.c.bf16 %v670, %v667
      %v698 = vpack.c.bf16 %v678, %v675
      %v699 = vpack.c.bf16 %v686, %v683
      %v700 = vpack.c.bf16 %v694, %v691
      %v701 = vld [vmem:[%s4] sm:$0x1]
      %v703 = vlaneseq
      %v704 = vshrl.u32 %v703, 7
      %v705 = vsub.s32 0, %v704
      %v706 = vrot.slane %v701, %v705
      %708 = vmatprep.subr.bf16.mxu0 0
      %709 = vmatpush1.bf16.msra.mxu0 %v697
      %710 = vmatprep.subr.bf16.mxu0 0
      %711 = vmatpush1.bf16.msra.mxu0 %v698
      %712 = vmatprep.subr.bf16.mxu0 0
      %713 = vmatpush1.bf16.msra.mxu0 %v699
      %714 = vmatprep.subr.bf16.mxu0 0
      %715 = vmatpush1.bf16.msra.mxu0 %v700
      %716 = vmatprep.subr.bf16.mxu0 0
      %717 = vmatpush1.bf16.msra.mxu0 0
      %718 = vmatprep.subr.bf16.mxu0 0
      %719 = vmatpush1.bf16.msra.mxu0 0
      %720 = vmatprep.subr.bf16.mxu0 0
      %721 = vmatpush1.bf16.msra.mxu0 0
      %722 = vmatprep.subr.bf16.mxu0 0
      %723 = vmatpush1.bf16.msra.mxu0 0
      %724 = vmatprep.subr.bf16.mxu0 0
      %725 = vmatpush1.bf16.msra.mxu0 0
      %726 = vmatprep.subr.bf16.mxu0 0
      %727 = vmatpush1.bf16.msra.mxu0 0
      %728 = vmatprep.subr.bf16.mxu0 0
      %729 = vmatpush1.bf16.msra.mxu0 0
      %730 = vmatprep.subr.bf16.mxu0 0
      %731 = vmatpush1.bf16.msra.mxu0 0
      %732 = vmatprep.subr.bf16.mxu0 0
      %733 = vmatpush1.bf16.msra.mxu0 0
      %734 = vmatprep.subr.bf16.mxu0 0
      %735 = vmatpush1.bf16.msra.mxu0 0
      %736 = vmatprep.subr.bf16.mxu0 0
      %737 = vmatpush1.bf16.msra.mxu0 0
      %738 = vmatprep.subr.bf16.mxu0 0
      %739 = vmatpush1.bf16.msra.mxu0 0
      %740 = vmatprep.mubr.bf16.mxu0 0
      %741 = vmatmul.mubr.bf16.gmra.mrb[0].mxu0 %v459
      %v742 = vpop.f32.mrb[0].mxu0
      %v743 = vadd.f32 %v706, %v742
      %v744 = vpop.f32.mrb[0].mxu0
      %v745 = vpop.f32.mrb[0].mxu0
      %v746 = vadd.f32 %v706, %v745
      %v747 = vpop.f32.mrb[0].mxu0
      %748 = vmatprep.mubr.bf16.mxu0 0
      %749 = vmatmul.mubr.bf16.gmra.mrb[0].mxu0 %v462
      %v750 = vpop.f32.mrb[0].mxu0
      %v751 = vadd.f32 %v706, %v750
      %v752 = vpop.f32.mrb[0].mxu0
      %v753 = vpop.f32.mrb[0].mxu0
      %v754 = vadd.f32 %v706, %v753
      %v755 = vpop.f32.mrb[0].mxu0
      %756 = vmatprep.mubr.bf16.mxu0 0
      %757 = vmatmul.mubr.bf16.gmra.mrb[0].mxu0 %v465
      %v758 = vpop.f32.mrb[0].mxu0
      %v759 = vadd.f32 %v706, %v758
      %v760 = vpop.f32.mrb[0].mxu0
      %v761 = vpop.f32.mrb[0].mxu0
      %v762 = vadd.f32 %v706, %v761
      %v763 = vpop.f32.mrb[0].mxu0
      %764 = vmatprep.mubr.bf16.mxu0 0
      %765 = vmatmul.mubr.bf16.gmra.mrb[0].mxu0 %v468
      %v766 = vpop.f32.mrb[0].mxu0
      %v767 = vadd.f32 %v706, %v766
      %v768 = vpop.f32.mrb[0].mxu0
      %v769 = vpop.f32.mrb[0].mxu0
      %v770 = vadd.f32 %v706, %v769
      %v771 = vpop.f32.mrb[0].mxu0
      %772 = vdwg.mxu0
      %v773 = vmax.f32 %v743, 0.0
      %v774 = vmax.f32 %v746, 0.0
      %v775 = vmax.f32 %v751, 0.0
      %v776 = vmax.f32 %v754, 0.0
      %v777 = vmax.f32 %v759, 0.0
      %v778 = vmax.f32 %v762, 0.0
      %v779 = vmax.f32 %v767, 0.0
      %v780 = vmax.f32 %v770, 0.0
      %v781 = vpack.c.bf16 %v774, %v773
      %v782 = vpack.c.bf16 %v776, %v775
      %v783 = vpack.c.bf16 %v778, %v777
      %v784 = vpack.c.bf16 %v780, %v779
      %v785 = vld [vmem:[%s5] sm:$0xf]
      %v786 = vld [vmem:[%s5 + $0x4] sm:$0xf]
      %v787 = vld [vmem:[%s5 + $0x8] sm:$0xf]
      %v788 = vld [vmem:[%s5 + $0xc] sm:$0xf]
      %v789 = vld [vmem:[%s6] sm:$0x1]
      %v791 = vlaneseq
      %v792 = vshrl.u32 %v791, 7
      %v793 = vsub.s32 0, %v792
      %v794 = vrot.slane %v789, %v793
      %v800 = vunpack.c.l.b16 %v785
      %v801 = vunpack.c.l.b16 %v786
      %v802 = vunpack.c.l.b16 %v787
      %v803 = vunpack.c.l.b16 %v788
      %v804 = vpack.c.b16 %v801, %v800
      %v805 = vpack.c.b16 %v803, %v802
      %v809 = vsel %vm551, %v781, 0
      %v812 = vsel %vm551, %v782, 0
      %v815 = vsel %vm551, %v783, 0
      %v818 = vsel %vm551, %v784, 0
      %820 = vmatprep.subr.bf16.mxu0 0
      %821 = vmatpush1.bf16.msra.mxu0 %v804
      %822 = vmatprep.subr.bf16.mxu0 0
      %823 = vmatpush1.bf16.msra.mxu0 %v805
      %824 = vmatprep.subr.bf16.mxu0 0
      %825 = vmatpush1.bf16.msra.mxu0 0
      %826 = vmatprep.subr.bf16.mxu0 0
      %827 = vmatpush1.bf16.msra.mxu0 0
      %828 = vmatprep.subr.bf16.mxu0 0
      %829 = vmatpush1.bf16.msra.mxu0 0
      %830 = vmatprep.subr.bf16.mxu0 0
      %831 = vmatpush1.bf16.msra.mxu0 0
      %832 = vmatprep.subr.bf16.mxu0 0
      %833 = vmatpush1.bf16.msra.mxu0 0
      %834 = vmatprep.subr.bf16.mxu0 0
      %835 = vmatpush1.bf16.msra.mxu0 0
      %836 = vmatprep.subr.bf16.mxu0 0
      %837 = vmatpush1.bf16.msra.mxu0 0
      %838 = vmatprep.subr.bf16.mxu0 0
      %839 = vmatpush1.bf16.msra.mxu0 0
      %840 = vmatprep.subr.bf16.mxu0 0
      %841 = vmatpush1.bf16.msra.mxu0 0
      %842 = vmatprep.subr.bf16.mxu0 0
      %843 = vmatpush1.bf16.msra.mxu0 0
      %844 = vmatprep.subr.bf16.mxu0 0
      %845 = vmatpush1.bf16.msra.mxu0 0
      %846 = vmatprep.subr.bf16.mxu0 0
      %847 = vmatpush1.bf16.msra.mxu0 0
      %848 = vmatprep.subr.bf16.mxu0 0
      %849 = vmatpush1.bf16.msra.mxu0 0
      %850 = vmatprep.subr.bf16.mxu0 0
      %851 = vmatpush1.bf16.msra.mxu0 0
      %852 = vmatprep.mubr.bf16.mxu0 0
      %853 = vmatmul.mubr.bf16.gmra.mrb[0].mxu0 %v621
      %v854 = vpop.f32.mrb[0].mxu0
      %v855 = vadd.f32 %v794, %v854
      %v856 = vpop.f32.mrb[0].mxu0
      %v857 = vpop.f32.mrb[0].mxu0
      %v858 = vadd.f32 %v794, %v857
      %v859 = vpop.f32.mrb[0].mxu0
      %860 = vmatprep.mubr.bf16.mxu0 0
      %861 = vmatmul.mubr.bf16.gmra.mrb[0].mxu0 %v624
      %v862 = vpop.f32.mrb[0].mxu0
      %v863 = vadd.f32 %v794, %v862
      %v864 = vpop.f32.mrb[0].mxu0
      %v865 = vpop.f32.mrb[0].mxu0
      %v866 = vadd.f32 %v794, %v865
      %v867 = vpop.f32.mrb[0].mxu0
      %868 = vmatprep.mubr.bf16.mxu0 0
      %869 = vmatmul.mubr.bf16.gmra.mrb[0].mxu0 %v627
      %v870 = vpop.f32.mrb[0].mxu0
      %v871 = vadd.f32 %v794, %v870
      %v872 = vpop.f32.mrb[0].mxu0
      %v873 = vpop.f32.mrb[0].mxu0
      %v874 = vadd.f32 %v794, %v873
      %v875 = vpop.f32.mrb[0].mxu0
      %876 = vmatprep.mubr.bf16.mxu0 0
      %877 = vmatmul.mubr.bf16.gmra.mrb[0].mxu0 %v630
      %v878 = vpop.f32.mrb[0].mxu0
      %v879 = vadd.f32 %v794, %v878
      %v880 = vpop.f32.mrb[0].mxu0
      %v881 = vpop.f32.mrb[0].mxu0
      %v882 = vadd.f32 %v794, %v881
      %v883 = vpop.f32.mrb[0].mxu0
      %884 = vmatprep.mubr.bf16.mxu0 0
      %885 = vmatmul.mubr.bf16.gmra.mrb[0].mxu0 %v809
      %v886 = vpop.f32.mrb[0].mxu0
      %v887 = vadd.f32 %v794, %v886
      %v888 = vpop.f32.mrb[0].mxu0
      %v889 = vpop.f32.mrb[0].mxu0
      %v890 = vadd.f32 %v794, %v889
      %v891 = vpop.f32.mrb[0].mxu0
      %892 = vmatprep.mubr.bf16.mxu0 0
      %893 = vmatmul.mubr.bf16.gmra.mrb[0].mxu0 %v812
      %v894 = vpop.f32.mrb[0].mxu0
      %v895 = vadd.f32 %v794, %v894
      %v896 = vpop.f32.mrb[0].mxu0
      %v897 = vpop.f32.mrb[0].mxu0
      %v898 = vadd.f32 %v794, %v897
      %v899 = vpop.f32.mrb[0].mxu0
      %900 = vmatprep.mubr.bf16.mxu0 0
      %901 = vmatmul.mubr.bf16.gmra.mrb[0].mxu0 %v815
      %v902 = vpop.f32.mrb[0].mxu0
      %v903 = vadd.f32 %v794, %v902
      %v904 = vpop.f32.mrb[0].mxu0
      %v905 = vpop.f32.mrb[0].mxu0
      %v906 = vadd.f32 %v794, %v905
      %v907 = vpop.f32.mrb[0].mxu0
      %908 = vmatprep.mubr.bf16.mxu0 0
      %909 = vmatmul.mubr.bf16.gmra.mrb[0].mxu0 %v818
      %v910 = vpop.f32.mrb[0].mxu0
      %v911 = vadd.f32 %v794, %v910
      %v912 = vpop.f32.mrb[0].mxu0
      %v913 = vpop.f32.mrb[0].mxu0
      %v914 = vadd.f32 %v794, %v913
      %v915 = vpop.f32.mrb[0].mxu0
      %916 = vdwg.mxu0
      %v917 = vmax.f32 %v855, 0.0
      %v918 = vmax.f32 %v858, 0.0
      %v919 = vmax.f32 %v863, 0.0
      %v920 = vmax.f32 %v866, 0.0
      %v921 = vmax.f32 %v871, 0.0
      %v922 = vmax.f32 %v874, 0.0
      %v923 = vmax.f32 %v879, 0.0
      %v924 = vmax.f32 %v882, 0.0
      %v925 = vmax.f32 %v887, 0.0
      %v926 = vmax.f32 %v890, 0.0
      %v927 = vmax.f32 %v895, 0.0
      %v928 = vmax.f32 %v898, 0.0
      %v929 = vmax.f32 %v903, 0.0
      %v930 = vmax.f32 %v906, 0.0
      %v931 = vmax.f32 %v911, 0.0
      %v932 = vmax.f32 %v914, 0.0
      %v933 = vpack.c.bf16 %v918, %v917
      %v934 = vpack.c.bf16 %v920, %v919
      %v935 = vpack.c.bf16 %v922, %v921
      %v936 = vpack.c.bf16 %v924, %v923
      %v937 = vpack.c.bf16 %v926, %v925
      %v938 = vpack.c.bf16 %v928, %v927
      %v939 = vpack.c.bf16 %v930, %v929
      %v940 = vpack.c.bf16 %v932, %v931
      %v941 = vld [vmem:[%s7] sm:$0xf]
      %v942 = vld [vmem:[%s7 + $0x4] sm:$0xf]
      %v943 = vld [vmem:[%s7 + $0x8] sm:$0xf]
      %v944 = vld [vmem:[%s7 + $0xc] sm:$0xf]
      %v945 = vld [vmem:[%s7 + $0x10] sm:$0xf]
      %v946 = vld [vmem:[%s7 + $0x14] sm:$0xf]
      %v947 = vld [vmem:[%s7 + $0x18] sm:$0xf]
      %v948 = vld [vmem:[%s7 + $0x1c] sm:$0xf]
      %v949 = vld [vmem:[%s8] sm:$0x1]
      %v951 = vlaneseq
      %v952 = vshrl.u32 %v951, 7
      %v953 = vsub.s32 0, %v952
      %v954 = vrot.slane %v949, %v953
      %v964 = vunpack.c.l.b16 %v941
      %v965 = vunpack.c.l.b16 %v942
      %v966 = vunpack.c.l.b16 %v943
      %v967 = vunpack.c.l.b16 %v944
      %v968 = vunpack.c.l.b16 %v945
      %v969 = vunpack.c.l.b16 %v946
      %v970 = vunpack.c.l.b16 %v947
      %v971 = vunpack.c.l.b16 %v948
      %v972 = vpack.c.b16 %v965, %v964
      %v973 = vpack.c.b16 %v967, %v966
      %v974 = vpack.c.b16 %v969, %v968
      %v975 = vpack.c.b16 %v971, %v970
      %v981 = vsel %vm457, %v933, 0
      %v984 = vsel %vm457, %v934, 0
      %v987 = vsel %vm457, %v935, 0
      %v990 = vsel %vm457, %v936, 0
      %v993 = vsel %vm457, %v937, 0
      %v996 = vsel %vm457, %v938, 0
      %v999 = vsel %vm457, %v939, 0
      %v1002 = vsel %vm457, %v940, 0
      %1004 = vmatprep.subr.bf16.mxu0 0
      %1005 = vmatpush1.bf16.msra.mxu0 %v972
      %1006 = vmatprep.subr.bf16.mxu0 0
      %1007 = vmatpush1.bf16.msra.mxu0 %v973
      %1008 = vmatprep.subr.bf16.mxu0 0
      %1009 = vmatpush1.bf16.msra.mxu0 %v974
      %1010 = vmatprep.subr.bf16.mxu0 0
      %1011 = vmatpush1.bf16.msra.mxu0 %v975
      %1012 = vmatprep.subr.bf16.mxu0 0
      %1013 = vmatpush1.bf16.msra.mxu0 0
      %1014 = vmatprep.subr.bf16.mxu0 0
      %1015 = vmatpush1.bf16.msra.mxu0 0
      %1016 = vmatprep.subr.bf16.mxu0 0
      %1017 = vmatpush1.bf16.msra.mxu0 0
      %1018 = vmatprep.subr.bf16.mxu0 0
      %1019 = vmatpush1.bf16.msra.mxu0 0
      %1020 = vmatprep.subr.bf16.mxu0 0
      %1021 = vmatpush1.bf16.msra.mxu0 0
      %1022 = vmatprep.subr.bf16.mxu0 0
      %1023 = vmatpush1.bf16.msra.mxu0 0
      %1024 = vmatprep.subr.bf16.mxu0 0
      %1025 = vmatpush1.bf16.msra.mxu0 0
      %1026 = vmatprep.subr.bf16.mxu0 0
      %1027 = vmatpush1.bf16.msra.mxu0 0
      %1028 = vmatprep.subr.bf16.mxu0 0
      %1029 = vmatpush1.bf16.msra.mxu0 0
      %1030 = vmatprep.subr.bf16.mxu0 0
      %1031 = vmatpush1.bf16.msra.mxu0 0
      %1032 = vmatprep.subr.bf16.mxu0 0
      %1033 = vmatpush1.bf16.msra.mxu0 0
      %1034 = vmatprep.subr.bf16.mxu0 0
      %1035 = vmatpush1.bf16.msra.mxu0 0
      %1036 = vmatprep.mubr.bf16.mxu0 0
      %1037 = vmatmul.mubr.bf16.gmra.mrb[0].mxu0 %v981
      %v1038 = vpop.f32.mrb[0].mxu0
      %v1039 = vadd.f32 %v954, %v1038
      %v1040 = vpop.f32.mrb[0].mxu0
      %v1041 = vpop.f32.mrb[0].mxu0
      %v1042 = vadd.f32 %v954, %v1041
      %v1043 = vpop.f32.mrb[0].mxu0
      %1044 = vmatprep.mubr.bf16.mxu0 0
      %1045 = vmatmul.mubr.bf16.gmra.mrb[0].mxu0 %v984
      %v1046 = vpop.f32.mrb[0].mxu0
      %v1047 = vadd.f32 %v954, %v1046
      %v1048 = vpop.f32.mrb[0].mxu0
      %v1049 = vpop.f32.mrb[0].mxu0
      %v1050 = vadd.f32 %v954, %v1049
      %v1051 = vpop.f32.mrb[0].mxu0
      %1052 = vmatprep.mubr.bf16.mxu0 0
      %1053 = vmatmul.mubr.bf16.gmra.mrb[0].mxu0 %v987
      %v1054 = vpop.f32.mrb[0].mxu0
      %v1055 = vadd.f32 %v954, %v1054
      %v1056 = vpop.f32.mrb[0].mxu0
      %v1057 = vpop.f32.mrb[0].mxu0
      %v1058 = vadd.f32 %v954, %v1057
      %v1059 = vpop.f32.mrb[0].mxu0
      %1060 = vmatprep.mubr.bf16.mxu0 0
      %1061 = vmatmul.mubr.bf16.gmra.mrb[0].mxu0 %v990
      %v1062 = vpop.f32.mrb[0].mxu0
      %v1063 = vadd.f32 %v954, %v1062
      %v1064 = vpop.f32.mrb[0].mxu0
      %v1065 = vpop.f32.mrb[0].mxu0
      %v1066 = vadd.f32 %v954, %v1065
      %v1067 = vpop.f32.mrb[0].mxu0
      %1068 = vmatprep.mubr.bf16.mxu0 0
      %1069 = vmatmul.mubr.bf16.gmra.mrb[0].mxu0 %v993
      %v1070 = vpop.f32.mrb[0].mxu0
      %v1071 = vadd.f32 %v954, %v1070
      %v1072 = vpop.f32.mrb[0].mxu0
      %v1073 = vpop.f32.mrb[0].mxu0
      %v1074 = vadd.f32 %v954, %v1073
      %v1075 = vpop.f32.mrb[0].mxu0
      %1076 = vmatprep.mubr.bf16.mxu0 0
      %1077 = vmatmul.mubr.bf16.gmra.mrb[0].mxu0 %v996
      %v1078 = vpop.f32.mrb[0].mxu0
      %v1079 = vadd.f32 %v954, %v1078
      %v1080 = vpop.f32.mrb[0].mxu0
      %v1081 = vpop.f32.mrb[0].mxu0
      %v1082 = vadd.f32 %v954, %v1081
      %v1083 = vpop.f32.mrb[0].mxu0
      %1084 = vmatprep.mubr.bf16.mxu0 0
      %1085 = vmatmul.mubr.bf16.gmra.mrb[0].mxu0 %v999
      %v1086 = vpop.f32.mrb[0].mxu0
      %v1087 = vadd.f32 %v954, %v1086
      %v1088 = vpop.f32.mrb[0].mxu0
      %v1089 = vpop.f32.mrb[0].mxu0
      %v1090 = vadd.f32 %v954, %v1089
      %v1091 = vpop.f32.mrb[0].mxu0
      %1092 = vmatprep.mubr.bf16.mxu0 0
      %1093 = vmatmul.mubr.bf16.gmra.mrb[0].mxu0 %v1002
      %v1094 = vpop.f32.mrb[0].mxu0
      %v1095 = vadd.f32 %v954, %v1094
      %v1096 = vpop.f32.mrb[0].mxu0
      %v1097 = vpop.f32.mrb[0].mxu0
      %v1098 = vadd.f32 %v954, %v1097
      %v1099 = vpop.f32.mrb[0].mxu0
      %1100 = vdwg.mxu0
      %v1101 = vmax.f32 %v1039, 0.0
      %v1102 = vmax.f32 %v1042, 0.0
      %v1103 = vmax.f32 %v1047, 0.0
      %v1104 = vmax.f32 %v1050, 0.0
      %v1105 = vmax.f32 %v1055, 0.0
      %v1106 = vmax.f32 %v1058, 0.0
      %v1107 = vmax.f32 %v1063, 0.0
      %v1108 = vmax.f32 %v1066, 0.0
      %v1109 = vmax.f32 %v1071, 0.0
      %v1110 = vmax.f32 %v1074, 0.0
      %v1111 = vmax.f32 %v1079, 0.0
      %v1112 = vmax.f32 %v1082, 0.0
      %v1113 = vmax.f32 %v1087, 0.0
      %v1114 = vmax.f32 %v1090, 0.0
      %v1115 = vmax.f32 %v1095, 0.0
      %v1116 = vmax.f32 %v1098, 0.0
      %v1117 = vld [vmem:[%s9] sm:$0x1]
      %v1119 = vlaneseq
      %v1120 = vshrl.u32 %v1119, 7
      %v1121 = vsub.s32 0, %v1120
      %v1122 = vrot.slane %v1117, %v1121
      %v1124 = vmul.f32 %v1101, %v1122
      %v1125 = vmul.f32 %v1102, %v1122
      %v1126 = vmul.f32 %v1103, %v1122
      %v1127 = vmul.f32 %v1104, %v1122
      %v1128 = vmul.f32 %v1105, %v1122
      %v1129 = vmul.f32 %v1106, %v1122
      %v1130 = vmul.f32 %v1107, %v1122
      %v1131 = vmul.f32 %v1108, %v1122
      %v1132 = vmul.f32 %v1109, %v1122
      %v1133 = vmul.f32 %v1110, %v1122
      %v1134 = vmul.f32 %v1111, %v1122
      %v1135 = vmul.f32 %v1112, %v1122
      %v1136 = vmul.f32 %v1113, %v1122
      %v1137 = vmul.f32 %v1114, %v1122
      %v1138 = vmul.f32 %v1115, %v1122
      %v1139 = vmul.f32 %v1116, %v1122
      %v1140 = vsel %vm457, %v1124, 0.0
      %1141 = vadd.xlane.f32.xlu0 %v1140
      %v1142 = vpop.xlane.xlu0 %1141
      %v1143 = vsel %vm457, %v1125, 0.0
      %1144 = vadd.xlane.f32.xlu0 %v1143
      %v1145 = vpop.xlane.xlu0 %1144
      %v1146 = vsel %vm457, %v1126, 0.0
      %1147 = vadd.xlane.f32.xlu0 %v1146
      %v1148 = vpop.xlane.xlu0 %1147
      %v1149 = vsel %vm457, %v1127, 0.0
      %1150 = vadd.xlane.f32.xlu0 %v1149
      %v1151 = vpop.xlane.xlu0 %1150
      %v1152 = vsel %vm457, %v1128, 0.0
      %1153 = vadd.xlane.f32.xlu0 %v1152
      %v1154 = vpop.xlane.xlu0 %1153
      %v1155 = vsel %vm457, %v1129, 0.0
      %1156 = vadd.xlane.f32.xlu0 %v1155
      %v1157 = vpop.xlane.xlu0 %1156
      %v1158 = vsel %vm457, %v1130, 0.0
      %1159 = vadd.xlane.f32.xlu0 %v1158
      %v1160 = vpop.xlane.xlu0 %1159
      %v1161 = vsel %vm457, %v1131, 0.0
      %1162 = vadd.xlane.f32.xlu0 %v1161
      %v1163 = vpop.xlane.xlu0 %1162
      %v1164 = vsel %vm457, %v1132, 0.0
      %1165 = vadd.xlane.f32.xlu0 %v1164
      %v1166 = vpop.xlane.xlu0 %1165
      %v1167 = vsel %vm457, %v1133, 0.0
      %1168 = vadd.xlane.f32.xlu0 %v1167
      %v1169 = vpop.xlane.xlu0 %1168
      %v1170 = vsel %vm457, %v1134, 0.0
      %1171 = vadd.xlane.f32.xlu0 %v1170
      %v1172 = vpop.xlane.xlu0 %1171
      %v1173 = vsel %vm457, %v1135, 0.0
      %1174 = vadd.xlane.f32.xlu0 %v1173
      %v1175 = vpop.xlane.xlu0 %1174
      %v1176 = vsel %vm457, %v1136, 0.0
      %1177 = vadd.xlane.f32.xlu0 %v1176
      %v1178 = vpop.xlane.xlu0 %1177
      %v1179 = vsel %vm457, %v1137, 0.0
      %1180 = vadd.xlane.f32.xlu0 %v1179
      %v1181 = vpop.xlane.xlu0 %1180
      %v1182 = vsel %vm457, %v1138, 0.0
      %1183 = vadd.xlane.f32.xlu0 %v1182
      %v1184 = vpop.xlane.xlu0 %1183
      %v1185 = vsel %vm457, %v1139, 0.0
      %1186 = vadd.xlane.f32.xlu0 %v1185
      %v1187 = vpop.xlane.xlu0 %1186
      %v1188 = vld [vmem:[#allocation2] sm:$0x1]
      %v1190 = vlaneseq
      %v1191 = vshrl.u32 %v1190, 7
      %v1192 = vsub.s32 0, %v1191
      %v1193 = vrot.slane %v1188, %v1192
      %v1195 = vadd.f32 %v1142, %v1193
      %v1196 = vadd.f32 %v1145, %v1193
      %v1197 = vadd.f32 %v1148, %v1193
      %v1198 = vadd.f32 %v1151, %v1193
      %v1199 = vadd.f32 %v1154, %v1193
      %v1200 = vadd.f32 %v1157, %v1193
      %v1201 = vadd.f32 %v1160, %v1193
      %v1202 = vadd.f32 %v1163, %v1193
      %v1203 = vadd.f32 %v1166, %v1193
      %v1204 = vadd.f32 %v1169, %v1193
      %v1205 = vadd.f32 %v1172, %v1193
      %v1206 = vadd.f32 %v1175, %v1193
      %v1207 = vadd.f32 %v1178, %v1193
      %v1208 = vadd.f32 %v1181, %v1193
      %v1209 = vadd.f32 %v1184, %v1193
      %v1210 = vadd.f32 %v1187, %v1193
      %v1211 = vadd.f32 %v1195, %v1203
      %v1212 = vadd.f32 %v1196, %v1204
      %v1213 = vadd.f32 %v1197, %v1205
      %v1214 = vadd.f32 %v1198, %v1206
      %v1215 = vadd.f32 %v1199, %v1207
      %v1216 = vadd.f32 %v1200, %v1208
      %v1217 = vadd.f32 %v1201, %v1209
      %v1218 = vadd.f32 %v1202, %v1210
      %vm1219 = vcmask 7168
      %1220 = vst.msk [vmem:[%s388] sm:$0xff] %vm1219, %v1211
      %1221 = vst.msk [vmem:[%s388 + $0x8] sm:$0xff] %vm1219, %v1212
      %1222 = vst.msk [vmem:[%s388 + $0x10] sm:$0xff] %vm1219, %v1213
      %1223 = vst.msk [vmem:[%s388 + $0x18] sm:$0xff] %vm1219, %v1214
      %1224 = vst.msk [vmem:[%s388 + $0x20] sm:$0xff] %vm1219, %v1215
      %1225 = vst.msk [vmem:[%s388 + $0x28] sm:$0xff] %vm1219, %v1216
      %1226 = vst.msk [vmem:[%s388 + $0x30] sm:$0xff] %vm1219, %v1217
      %1227 = vst.msk [vmem:[%s388 + $0x38] sm:$0xff] %vm1219, %v1218
      %p1228 = scmp.lt.s32.totalorder %s24, 1
      %s1229 = scalar_select %p1228, %s24, 1
      %s1230 = smul.addr %s1229, 8
      %s1231 = smul.addr %s1230, 8
      %s1232 = scalar_lea.vmem %s11, %s1231
      // Predicated region
      $region65: #{gnn_bet1_forward.1} parent=63 // pred_check
        %p1233 = pneg %p278
      $region66: #{gnn_bet1_forward.1} parent=63 // pred_check_branch
        %1235 = sbr.rel (%p1233) target = $region68
      $region67: #{gnn_bet1_forward.1} parent=63 // pred_region
        _
      $region68: #{gnn_bet1_forward.1} parent=63 // pred_fallthru
        _
    $region64: #{gnn_bet1_forward.1} parent=5 // pred_fallthru
      _
    %p1236 = scmp.le.s32.totalorder 2, %s19
    // Predicated region
    $region69: #{gnn_bet1_forward.1} parent=5 // pred_check
      %p1237 = pneg %p1236
    $region70: #{gnn_bet1_forward.1} parent=5 // pred_check_branch
      %1239 = sbr.rel (%p1237) target = $region72
    $region71: #{gnn_bet1_forward.1} parent=5 // pred_region
      %s1240 = ssub.s32 %s19, 2
      // Predicated region
      $region73: #{gnn_bet1_forward.1} parent=71 // pred_check
        %p1241 = pneg %p284
      $region74: #{gnn_bet1_forward.1} parent=71 // pred_check_branch
        %1243 = sbr.rel (%p1241) target = $region76
      $region75: #{gnn_bet1_forward.1} parent=71 // pred_region
        %p1244 = scmp.lt.s32.totalorder %s25, 1
        %s1245 = scalar_select %p1244, %s25, 1
        %s1246 = smul.addr %s1245, 8
        %s1247 = smul.addr %s1246, 8
        %s1248 = scalar_lea.vmem %s11, %s1247
      $region76: #{gnn_bet1_forward.1} parent=71 // pred_fallthru
        _
    $region72: #{gnn_bet1_forward.1} parent=5 // pred_fallthru
      _
  $region6: #{gnn_bet1_forward.1} parent=0 // loop_footer
    %s23 = sadd.s32 1, %s19
  $region7: #{gnn_bet1_forward.1} parent=0 // loop_footer_branch
    %18 = sbr.rel target = $region3
  $region8: #{gnn_bet1_forward.1} parent=0 // loop_exit
    _

</llo_original>
